<compile_context>
chip_gen: v5e
topology: v5e:2x2
jax: 0.10.0
libtpu: 0.0.40
codegen_flags: <defaults>
</compile_context>

<pallas_src>
import functools

import jax
import jax.numpy as jnp
from jax.experimental import pallas as pl
from jax.experimental.pallas import tpu as pltpu


def _rmsnorm_kernel(x_ref, scale_ref, o_ref, *, d, eps):
    # x_ref: (tile_rows, d), scale_ref: (1, d), o_ref: (tile_rows, d)
    xf = x_ref[...].astype(jnp.float32)
    ssq = jnp.sum(xf * xf, axis=-1, keepdims=True)          # (tile_rows, 1), f32
    rms = jnp.sqrt(ssq) * (float(d) ** -0.5)                 # ||x||_2 / sqrt(d)
    # Per-row reciprocal on the (tile_rows, 1) column goes to the EUP slot;
    # the full-width op is then a single VPU multiply instead of a divide.
    inv = pl.reciprocal(rms + eps, approx=False)

    if x_ref.dtype == jnp.float32:
        out = (xf * inv) * scale_ref[...].astype(jnp.float32)
        o_ref[...] = out.astype(o_ref.dtype)
    else:
        # Sub-32-bit input: multiply at native width (bf16 VPU on v6e/v7x) so
        # the f32 upcast is only live for the reduction, halving intermediate VMEM.
        xn = x_ref[...] * inv.astype(x_ref.dtype)
        o_ref[...] = (xn * scale_ref[...].astype(x_ref.dtype)).astype(o_ref.dtype)


def _round_up(x, m):
    return ((x + m - 1) // m) * m


def _vmem_capacity_bytes():
    try:
        return int(pltpu.get_tpu_info().vmem_capacity_bytes)
    except Exception:
        return 64 * 1024 * 1024  # assume the smallest generation (v7x) if unknown


def _pick_tile_rows(rows, d, itemsize, vmem_cap):
    """Row tile sized by bytes: big enough to amortize grid-step overhead, small
    enough for the per-generation VMEM budget, and leaving >= 8 steps when rows
    is large (pipeline overlap + v7x 2-TC megacore sharding)."""
    # Sublane packing: f32 -> 8 rows/vreg, bf16 -> 16, int8/fp8 -> 32.
    pack = 8 * max(1, 4 // int(itemsize))

    # VMEM bytes per tile row:
    #   4 * d * itemsize : 2 double-buffered input blocks + 2 output blocks
    # + 2 * d * 4        : in-kernel f32 upcast + f32 intermediate of the tile
    bytes_per_row = 4 * d * int(itemsize) + 2 * d * 4
    budget = vmem_cap // 2            # 64 MiB on v5e/v6e (128 MiB VMEM), 32 MiB on v7x
    t_budget = budget // bytes_per_row

    # ~4 MiB per input block: measured streaming kernels reach ~86% of HBM
    # roofline there; smaller blocks leave bandwidth on the table (worst on v7x).
    t_target = max(pack, (4 * 1024 * 1024) // (d * int(itemsize)))

    t = min(int(t_budget), int(t_target))

    # Keep >= 8 grid steps for large inputs so "parallel" can split rows across
    # v7x's 2 TensorCores and the double-buffer pipeline has work to overlap.
    if rows >= 8 * pack:
        t = min(t, -(-rows // 8))     # cdiv(rows, 8)

    t = max(pack, (int(t) // pack) * pack)
    t = min(t, _round_up(rows, pack))  # never larger than the row count
    return max(t, pack)


def rmsnorm(x, scale, *, eps=1e-8, tile_rows=None):
    """x: (..., d) array; scale: (d,) parameter. Returns same shape/dtype as x."""
    orig_shape = x.shape
    d = orig_shape[-1]
    rows = 1
    for s in orig_shape[:-1]:
        rows *= s
    x2 = x.reshape(rows, d)
    scale2 = scale.reshape(1, d)

    itemsize = int(jnp.dtype(x.dtype).itemsize)
    vmem_cap = _vmem_capacity_bytes()
    if tile_rows is None:
        tile_rows = _pick_tile_rows(rows, d, itemsize, vmem_cap)

    # Ragged final block: no host-side padding / slicing (no extra HBM passes).
    grid = (pl.cdiv(rows, tile_rows),)

    # Scoped-VMEM limit: pipeline buffers + f32 intermediates + scale + headroom,
    # clamped to the chip's physical VMEM.
    buffer_bytes = (4 * tile_rows * d * itemsize      # double-buffered in/out blocks
                    + 2 * tile_rows * d * 4           # f32 intermediates in the body
                    + 2 * d * itemsize)               # resident scale
    vmem_limit = int(min(vmem_cap, max(32 << 20, buffer_bytes + (8 << 20))))

    kernel = functools.partial(_rmsnorm_kernel, d=d, eps=eps)

    cost = pl.CostEstimate(
        flops=3 * rows * d,
        transcendentals=rows,
        bytes_accessed=2 * rows * d * itemsize + d * itemsize,
    )

    out = pl.pallas_call(
        kernel,
        out_shape=jax.ShapeDtypeStruct((rows, d), x.dtype),
        grid_spec=pltpu.PrefetchScalarGridSpec(
            num_scalar_prefetch=0,
            grid=grid,
            in_specs=[
                pl.BlockSpec((tile_rows, d), lambda i: (i, 0)),
                pl.BlockSpec((1, d), lambda i: (0, 0)),   # scale stays resident
            ],
            out_specs=pl.BlockSpec((tile_rows, d), lambda i: (i, 0)),
        ),
        compiler_params=pltpu.CompilerParams(
            dimension_semantics=("parallel",),   # row axis shards across v7x's 2 TCs
            vmem_limit_bytes=vmem_limit,
        ),
        cost_estimate=cost,
    )(x2, scale2)

    return out.reshape(orig_shape)


def rmsnorm_ref(x, scale, *, eps=1e-8):
    d = x.shape[-1]
    xf = x.astype(jnp.float32)
    norm_x = jnp.sqrt(jnp.sum(xf * xf, axis=-1, keepdims=True))
    rms_x = norm_x * (float(d) ** -0.5)
    return (scale.astype(jnp.float32) * (xf / (rms_x + eps))).astype(x.dtype)


if __name__ == "__main__":
    key = jax.random.PRNGKey(0)

    # Case 1: shape implied by the module demo (batch=2, seq=8, d=32).
    # d=32 is only legal because the block's last dim equals the full array dim;
    # production shapes want d % 128 == 0.
    batch, seq, d = 2, 8, 32
    x1 = jax.random.normal(key, (batch, seq, d), dtype=jnp.float32)
    scale1 = jnp.ones((d,), dtype=jnp.float32)  # nn.Parameter(torch.ones(d))
    y1 = jax.block_until_ready(rmsnorm(x1, scale1, eps=1e-8))
    y1_ref = rmsnorm_ref(x1, scale1, eps=1e-8)
    assert y1.shape == x1.shape and y1.dtype == x1.dtype
    assert jnp.allclose(y1, y1_ref, atol=1e-5, rtol=1e-5)

    # Case 2: lane-dense d=128 with rows (=15) NOT a tile multiple — exercises the
    # ragged final block (no host padding / slicing anymore).
    x2 = jax.random.normal(jax.random.PRNGKey(1), (3, 5, 128), dtype=jnp.float32)
    scale2 = jax.random.normal(jax.random.PRNGKey(2), (128,), dtype=jnp.float32)
    y2 = jax.block_until_ready(rmsnorm(x2, scale2, eps=1e-8))
    y2_ref = rmsnorm_ref(x2, scale2, eps=1e-8)
    assert y2.shape == x2.shape and y2.dtype == x2.dtype
    assert jnp.allclose(y2, y2_ref, atol=1e-5, rtol=1e-5)

    # Case 3: bf16 input — exercises the native-width multiply path (ssq still f32).
    x3 = jax.random.normal(jax.random.PRNGKey(3), (4, 7, 128), dtype=jnp.bfloat16)
    scale3 = jnp.ones((128,), dtype=jnp.float32)
    y3 = jax.block_until_ready(rmsnorm(x3, scale3, eps=1e-8))
    y3_ref = rmsnorm_ref(x3, scale3, eps=1e-8)
    assert y3.shape == x3.shape and y3.dtype == x3.dtype
    assert jnp.allclose(y3.astype(jnp.float32), y3_ref.astype(jnp.float32),
                        atol=3e-2, rtol=3e-2)

    print("KERNEL_OK")
</pallas_src>

<mosaic_0001>
module attributes {stable_mosaic.version = 11 : i64} {
  func.func @_rmsnorm_kernel(%arg0: i32, %arg1: memref<16x32xf32, #tpu.memory_space<vmem>>, %arg2: memref<1x32xf32, #tpu.memory_space<vmem>>, %arg3: memref<16x32xf32, #tpu.memory_space<vmem>>) attributes {dimension_semantics = [#tpu.dimension_semantics<parallel>], iteration_bounds = array<i64: 1>, scalar_prefetch = 0 : i64, scratch_operands = 0 : i64, tpu.core_type = #tpu.core_type<tc>, window_params = [{transform_indices = @transform_0, window_bounds = array<i64: 16, 32>}, {pipeline_mode = #tpu.pipeline_mode<synchronous>, transform_indices = @transform_1, window_bounds = array<i64: 1, 32>}, {transform_indices = @transform_2, window_bounds = array<i64: 16, 32>}]} {
    %c0 = arith.constant 0 : index
    %c0_0 = arith.constant 0 : index
    %0 = vector.load %arg1[%c0, %c0_0] : memref<16x32xf32, #tpu.memory_space<vmem>>, vector<16x32xf32>
    %1 = arith.mulf %0, %0 : vector<16x32xf32>
    %cst = arith.constant dense<0.000000e+00> : vector<16xf32>
    %2 = vector.multi_reduction <add>, %1, %cst [1] : vector<16x32xf32> to vector<16xf32>
    %3 = vector.shape_cast %2 : vector<16xf32> to vector<16x1xf32>
    %4 = math.sqrt %3 : vector<16x1xf32>
    %cst_1 = arith.constant 0.176776692 : f32
    %5 = vector.broadcast %cst_1 : f32 to vector<16x1xf32>
    %6 = arith.mulf %4, %5 : vector<16x1xf32>
    %cst_2 = arith.constant 9.99999993E-9 : f32
    %7 = vector.broadcast %cst_2 : f32 to vector<16x1xf32>
    %8 = arith.addf %6, %7 : vector<16x1xf32>
    %9 = tpu.reciprocal %8 : vector<16x1xf32> -> vector<16x1xf32>
    %10 = vector.broadcast %9 : vector<16x1xf32> to vector<16x32xf32>
    %11 = arith.mulf %0, %10 : vector<16x32xf32>
    %c0_3 = arith.constant 0 : index
    %c0_4 = arith.constant 0 : index
    %12 = vector.load %arg2[%c0_3, %c0_4] : memref<1x32xf32, #tpu.memory_space<vmem>>, vector<1x32xf32>
    %13 = vector.broadcast %12 : vector<1x32xf32> to vector<16x32xf32>
    %14 = arith.mulf %11, %13 : vector<16x32xf32>
    %c0_5 = arith.constant 0 : index
    %c0_6 = arith.constant 0 : index
    %15 = vector.load %arg3[%c0_5, %c0_6] : memref<16x32xf32, #tpu.memory_space<vmem>>, vector<16x32xf32>
    tpu.vector_store %arg3[%c0_5, %c0_6], %14 {strides = array<i32>} : memref<16x32xf32, #tpu.memory_space<vmem>>, vector<16x32xf32>,
    return
  }
  func.func @transform_0(%arg0: i32) -> (i32, i32) {
    %c0_i32 = arith.constant 0 : i32
    %c0_i32_0 = arith.constant 0 : i32
    return %arg0, %c0_i32 : i32, i32
  }
  func.func @transform_1(%arg0: i32) -> (i32, i32) {
    %c0_i32 = arith.constant 0 : i32
    %c0_i32_0 = arith.constant 0 : i32
    %c0_i32_1 = arith.constant 0 : i32
    return %c0_i32, %c0_i32_0 : i32, i32
  }
  func.func @transform_2(%arg0: i32) -> (i32, i32) {
    %c0_i32 = arith.constant 0 : i32
    %c0_i32_0 = arith.constant 0 : i32
    return %arg0, %c0_i32 : i32, i32
  }
}

</mosaic_0001>

<llo_original>
// kernel: tpu_custom_call.1
$region0: #{tpu_custom_call.1}
  #allocation0 [shape = 'u32[]', space=smem, size = 0x4, offset = 0x4, fixed_abs, tag = 'smem constant byte address 0x4 - core index']
  #allocation1 [shape = 'u32[72,128]{1,0:T(1,128)}', space=vmem, size = 0x9000, scoped, tag = 'internal scratch']
  %s0 = inlined_call_operand.hbm [shape: f32[16,32], index: 0, kind: input, shape index: {}]
  %s1 = inlined_call_operand.hbm [shape: f32[1,32], index: 1, kind: input, shape index: {}]
  %s2 = inlined_call_operand.hbm [shape: f32[16,32], index: 2, kind: output, shape index: {}]
  %s3 = sld [smem:[#allocation0]]
  $region26: #{tpu_custom_call.1} parent=0
    _
  %s5 = ssub.s32 1, %s3
  %s6 = scalar_select 0, %s5, %s3
  $region1: #{tpu_custom_call.1} parent=0
    #allocation2 [shape = 'u8[8192]{0}', space=vmem, size = 0x2000, scoped, tag = 'input window, operand 0, single buffered']
    #allocation3 [shape = 's32[1]{0}', space=sflag, size = 0x4, scoped, tag = 'scoped memory for tpu_custom_call.1']
    #allocation4 [shape = 's32[1]{0}', space=sflag, size = 0x4, scoped, tag = 'scoped memory for tpu_custom_call.1']
    #allocation5 [shape = 'u8[512]{0}', space=vmem, size = 0x400, scoped, tag = 'input window, operand 1, single buffered']
    #allocation6 [shape = 's32[1]{0}', space=sflag, size = 0x4, scoped, tag = 'scoped memory for tpu_custom_call.1']
    #allocation7 [shape = 'u8[8192]{0}', space=vmem, size = 0x2000, scoped, tag = 'output window, operand 0, single buffered']
    %7 = vsyncpa [#allocation3], 0
    %8 = vsyncpa [#allocation6], 0
    %9 = vsyncpa [#allocation4], 0
    // Predicated region
    $region2: #{tpu_custom_call.1} parent=1 // pred_check
      _
    $region3: #{tpu_custom_call.1} parent=1 // pred_check_branch
      %11 = sbr.rel (0) target = $region5
    $region4: #{tpu_custom_call.1} parent=1 // pred_region
      %13 = vsyncadd [#allocation3], 0
      %s14 = sshll.u32 %s0, 4
      %s15 = int_to_ptr.hbm [resolvable:$true] %s14
      %s16 = sshll.u32 [#allocation2], 4
      %s17 = int_to_ptr.vmem [resolvable:$true] %s16
      %22 = dma.hbm_to_vmem [thread:$0]  %s15, 256, %s17, [#allocation3], 128, 128, 8
    $region5: #{tpu_custom_call.1} parent=1 // pred_fallthru
      _
    // Predicated region
    $region6: #{tpu_custom_call.1} parent=1 // pred_check
      _
    $region7: #{tpu_custom_call.1} parent=1 // pred_check_branch
      %24 = sbr.rel (0) target = $region9
    $region8: #{tpu_custom_call.1} parent=1 // pred_region
      %26 = vsyncadd [#allocation6], 0
      %s28 = sshll.u32 %s1, 4
      %s29 = int_to_ptr.hbm [resolvable:$true] %s28
      %s30 = sshll.u32 [#allocation5], 4
      %s31 = int_to_ptr.vmem [resolvable:$true] %s30
      %33 = dma.hbm_to_vmem [thread:$0]  %s29, 16, %s31, [#allocation6]
    $region9: #{tpu_custom_call.1} parent=1 // pred_fallthru
      _
    // Predicated region
    $region10: #{tpu_custom_call.1} parent=1 // pred_check
      _
    $region11: #{tpu_custom_call.1} parent=1 // pred_check_branch
      %35 = sbr.rel (0) target = $region13
    $region12: #{tpu_custom_call.1} parent=1 // pred_region
      %37 = dma.done [#allocation3], 256
    $region13: #{tpu_custom_call.1} parent=1 // pred_fallthru
      _
    // Predicated region
    $region14: #{tpu_custom_call.1} parent=1 // pred_check
      _
    $region15: #{tpu_custom_call.1} parent=1 // pred_check_branch
      %39 = sbr.rel (0) target = $region17
    $region16: #{tpu_custom_call.1} parent=1 // pred_region
      %41 = dma.done [#allocation6], 16
    $region17: #{tpu_custom_call.1} parent=1 // pred_fallthru
      _
    %v42 = vld [vmem:[#allocation2] sm:$0xff]
    %v43 = vld [vmem:[#allocation2 + $0x8] sm:$0xff]
    %v44 = vmul.f32 %v42, %v42
    %v45 = vmul.f32 %v43, %v43
    %vm46 = vcmask 261120
    %v47 = vsel %vm46, %v44, 0.0
    %48 = vadd.xlane.f32.xlu0 %v47
    %v49 = vpop.xlane.xlu0 %48
    %v50 = vsel %vm46, %v45, 0.0
    %51 = vadd.xlane.f32.xlu0 %v50
    %v52 = vpop.xlane.xlu0 %51
    %v53 = vrsqrt.pop %v49
    %v54 = vmul.f32 %v53, %v49
    %v55 = vmul.f32 %v54, %v53
    %v56 = vmul.f32 0.5, %v55
    %v57 = vsub.f32 1.5, %v56
    %v58 = vmul.f32 %v53, %v57
    %v59 = vmul.f32 %v49, %v58
    %vm60 = vcmp.eq.f32.partialorder %v49, inf
    %v61 = vsel %vm60, %v49, %v59
    %vm62 = vcmp.eq.f32.partialorder %v49, 0.0
    %v63 = vand.u32 %v49, 2147483648
    %v64 = vsel %vm62, %v63, %v61
    %v65 = vrsqrt.pop %v52
    %v66 = vmul.f32 %v65, %v52
    %v67 = vmul.f32 %v66, %v65
    %v68 = vmul.f32 0.5, %v67
    %v69 = vsub.f32 1.5, %v68
    %v70 = vmul.f32 %v65, %v69
    %v71 = vmul.f32 %v52, %v70
    %vm72 = vcmp.eq.f32.partialorder %v52, inf
    %v73 = vsel %vm72, %v52, %v71
    %vm74 = vcmp.eq.f32.partialorder %v52, 0.0
    %v75 = vand.u32 %v52, 2147483648
    %v76 = vsel %vm74, %v75, %v73
    %v77 = vmul.f32 %v64, 0.17677669
    %v78 = vmul.f32 %v76, 0.17677669
    %v79 = vadd.f32 %v77, 1e-08
    %v80 = vadd.f32 %v78, 1e-08
    %v81 = vrcp.pop %v79
    %v82 = vmul.f32 %v79, %v81
    %v83 = vsub.f32 1.0, %v82
    %v84 = vmul.f32 %v81, %v83
    %v85 = vadd.f32 %v81, %v84
    %vm86 = vweird.f32 %v79
    %vm87 = vweird.f32 %v81
    %vm88 = vmor %vm86, %vm87
    %v89 = vsel %vm88, %v81, %v85
    %v90 = vand.u32 2147483647, %v79
    %vm91 = vcmp.eq.f32.partialorder %v90, 8.507059e+37
    %v92 = vand.u32 %v79, 2147483648
    %v93 = vor.u32 1.1754944e-38, %v92
    %v94 = vsel %vm91, %v93, %v89
    %v95 = vrcp.pop %v80
    %v96 = vmul.f32 %v80, %v95
    %v97 = vsub.f32 1.0, %v96
    %v98 = vmul.f32 %v95, %v97
    %v99 = vadd.f32 %v95, %v98
    %vm100 = vweird.f32 %v80
    %vm101 = vweird.f32 %v95
    %vm102 = vmor %vm100, %vm101
    %v103 = vsel %vm102, %v95, %v99
    %v104 = vand.u32 2147483647, %v80
    %vm105 = vcmp.eq.f32.partialorder %v104, 8.507059e+37
    %v106 = vand.u32 %v80, 2147483648
    %v107 = vor.u32 1.1754944e-38, %v106
    %v108 = vsel %vm105, %v107, %v103
    %v109 = vmul.f32 %v42, %v94
    %v110 = vmul.f32 %v43, %v108
    %v111 = vld [vmem:[#allocation5] sm:$0x1]
    %v113 = vperm.slane %v111, 0
    %v115 = vmul.f32 %v109, %v113
    %v116 = vmul.f32 %v110, %v113
    %117 = vst.msk [vmem:[#allocation7] sm:$0xff] %vm46, %v115
    %118 = vst.msk [vmem:[#allocation7 + $0x8] sm:$0xff] %vm46, %v116
    // Predicated region
    $region18: #{tpu_custom_call.1} parent=1 // pred_check
      _
    $region19: #{tpu_custom_call.1} parent=1 // pred_check_branch
      %120 = sbr.rel (0) target = $region21
    $region20: #{tpu_custom_call.1} parent=1 // pred_region
      %122 = vsyncadd [#allocation4], 0
      %s123 = sshll.u32 [#allocation7], 4
      %s124 = int_to_ptr.vmem [resolvable:$true] %s123
      %s125 = sshll.u32 %s2, 4
      %s126 = int_to_ptr.hbm [resolvable:$true] %s125
      %131 = dma.vmem_to_hbm [thread:$0]  %s124, 256, %s126, [#allocation4], 128, 128, 8
    $region21: #{tpu_custom_call.1} parent=1 // pred_fallthru
      _
    // Predicated region
    $region22: #{tpu_custom_call.1} parent=1 // pred_check
      _
    $region23: #{tpu_custom_call.1} parent=1 // pred_check_branch
      %133 = sbr.rel (0) target = $region25
    $region24: #{tpu_custom_call.1} parent=1 // pred_region
      %135 = dma.done [#allocation4], 256
    $region25: #{tpu_custom_call.1} parent=1 // pred_fallthru
      _
    %136 = vsyncpa [#allocation3], 1
    %137 = vsyncpa [#allocation6], 1
    %138 = vsyncpa [#allocation4], 1

</llo_original>
